<compile_context>
chip_gen: v5e
topology: v5e:2x2
jax: 0.10.0
libtpu: 0.0.40
codegen_flags: <defaults>
</compile_context>

<pallas_src>
import jax
import jax.numpy as jnp
from jax.experimental import pallas as pl
from jax.experimental.pallas import tpu as pltpu


# ----------------------------------------------------------------------------
# Fused Pallas kernel
# ----------------------------------------------------------------------------
def _ce_sums(logits, labels):
    """Returns (sum of per-row NLL over valid rows, valid-row count).

    labels: (N, 1) int32; rows with label < 0 (ignore_index=-100) are skipped.
    """
    m = jnp.max(logits, axis=-1, keepdims=True)
    lse = m + jnp.log(jnp.sum(jnp.exp(logits - m), axis=-1, keepdims=True))
    cls_idx = jax.lax.broadcasted_iota(jnp.int32, logits.shape, 1)
    onehot = cls_idx == labels                                   # (N, C)
    picked = jnp.sum(jnp.where(onehot, logits, 0.0), axis=-1, keepdims=True)
    valid = labels >= 0
    loss = jnp.where(valid, lse - picked, 0.0)                   # (N, 1)
    return jnp.sum(loss), jnp.sum(valid.astype(jnp.float32))


def _fused_kernel(h_ref, w1_ref, b1_ref, w2_ref, b2_ref,
                  lmw_ref, lmb_ref, aw_ref, ab_ref,
                  blab_ref, alab_ref,
                  logits_ref, sums_ref):
    h = h_ref[...]                                               # (M, H)

    # FFN block (MXU)
    h1 = jnp.dot(h, w1_ref[...], preferred_element_type=jnp.float32) + b1_ref[...]
    h1 = jax.nn.gelu(h1)
    h2 = jnp.dot(h1, w2_ref[...], preferred_element_type=jnp.float32) + b2_ref[...]
    hres = h + h2                                                # residual

    # LM decoder to vocab — the only tensor written back to HBM (lane-dense).
    logits = jnp.dot(hres, lmw_ref[...], preferred_element_type=jnp.float32) + lmb_ref[...]
    logits_ref[...] = logits.astype(logits_ref.dtype)

    # MLM cross-entropy (sum + valid count), reduced in-kernel.
    b_sum, b_cnt = _ce_sums(logits, blab_ref[...])

    # Additional head: Linear(vocab_size -> addi_dim) on the logits, then CE.
    addi = jnp.dot(logits, aw_ref[...], preferred_element_type=jnp.float32) + ab_ref[...]
    a_sum, a_cnt = _ce_sums(addi, alab_ref[...])

    sums_ref[0] = b_sum
    sums_ref[1] = b_cnt
    sums_ref[2] = a_sum
    sums_ref[3] = a_cnt


def fused_bert_forward(h, params, bert_labels, addi_labels):
    """One pallas_call for FFN -> LM decoder -> both CE losses -> addi head."""
    M, _ = h.shape
    V = params["lm_w"].shape[1]

    vmem_specs = [pl.BlockSpec(memory_space=pltpu.MemorySpace.VMEM)
                  for _ in range(11)]

    logits, sums = pl.pallas_call(
        _fused_kernel,
        out_shape=(
            jax.ShapeDtypeStruct((M, V), jnp.float32),   # bert logits (lane-dense)
            jax.ShapeDtypeStruct((4,), jnp.float32),     # [b_sum, b_cnt, a_sum, a_cnt]
        ),
        in_specs=vmem_specs,
        out_specs=(
            pl.BlockSpec(memory_space=pltpu.MemorySpace.VMEM),
            pl.BlockSpec(memory_space=pltpu.MemorySpace.SMEM),
        ),
    )(h,
      params["ffn_w1"], params["ffn_b1"],
      params["ffn_w2"], params["ffn_b2"],
      params["lm_w"], params["lm_b"],
      params["addi_w"], params["addi_b"],
      bert_labels, addi_labels)
    return logits, sums


# ----------------------------------------------------------------------------
# Model config / parameters (deterministic synthetic init)
# ----------------------------------------------------------------------------
class Config:
    vocab_size = 256
    hidden = 128
    intermediate = 256
    max_seq = 8
    addi_dim = 128
    class_weights = (1.0, 0.5)


def init_params(cfg, key):
    ks = jax.random.split(key, 8)
    s = 0.02
    return {
        "word_emb": jax.random.normal(ks[0], (cfg.vocab_size, cfg.hidden), jnp.float32) * s,
        "pos_emb": jax.random.normal(ks[1], (cfg.max_seq, cfg.hidden), jnp.float32) * s,
        "ffn_w1": jax.random.normal(ks[2], (cfg.hidden, cfg.intermediate), jnp.float32) * s,
        "ffn_b1": jnp.zeros((1, cfg.intermediate), jnp.float32),
        "ffn_w2": jax.random.normal(ks[3], (cfg.intermediate, cfg.hidden), jnp.float32) * s,
        "ffn_b2": jnp.zeros((1, cfg.hidden), jnp.float32),
        "lm_w": jax.random.normal(ks[4], (cfg.hidden, cfg.vocab_size), jnp.float32) * s,
        "lm_b": jnp.zeros((1, cfg.vocab_size), jnp.float32),
        # addi_head = nn.Linear(vocab_size, addi_dim)
        "addi_w": jax.random.normal(ks[5], (cfg.vocab_size, cfg.addi_dim), jnp.float32) * s,
        "addi_b": jax.random.normal(ks[6], (1, cfg.addi_dim), jnp.float32) * s,
    }


# ----------------------------------------------------------------------------
# Forward pass (mirrors BertWithAdditionalTask.forward, full-label path)
# ----------------------------------------------------------------------------
def bert_with_additional_task_forward(params, cfg, input_ids, input_labels, addi_labels):
    B, S = input_ids.shape
    V = cfg.vocab_size

    # Embedding glue (XLA gather) -> (B*S, hidden).
    h = params["word_emb"][input_ids] + params["pos_emb"][jnp.arange(S)][None, :, :]
    h = h.reshape(B * S, cfg.hidden)

    blab = input_labels.reshape(-1, 1).astype(jnp.int32)
    alab = addi_labels.reshape(-1, 1).astype(jnp.int32)

    logits2d, sums = fused_bert_forward(h, params, blab, alab)
    bert_logits = logits2d.reshape(B, S, V)

    # mean over valid rows (matches nn.CrossEntropyLoss with ignore_index=-100)
    bert_loss = sums[0] / sums[1]
    addi_loss = sums[2] / sums[3]
    total_loss = cfg.class_weights[0] * bert_loss + cfg.class_weights[1] * addi_loss
    return {
        "loss": total_loss,
        "logits": bert_logits,
        "addi_loss": addi_loss,
        "bert_loss": bert_loss,
    }


# ----------------------------------------------------------------------------
if __name__ == "__main__":
    cfg = Config()
    key = jax.random.PRNGKey(0)
    k_param, k_ids, k_lab, k_mask, k_addi = jax.random.split(key, 5)

    params = init_params(cfg, k_param)

    B, S = 2, cfg.max_seq
    input_ids = jax.random.randint(k_ids, (B, S), 0, cfg.vocab_size, jnp.int32)
    input_labels = jax.random.randint(k_lab, (B, S), 0, cfg.vocab_size, jnp.int32)
    # emulate MLM labels: positions not masked get ignore_index = -100
    mask = jax.random.bernoulli(k_mask, 0.3, (B, S))
    input_labels = jnp.where(mask, input_labels, -100)
    addi_labels = jax.random.randint(k_addi, (B, S), 0, cfg.addi_dim, jnp.int32)

    fwd = jax.jit(
        lambda p, ids, il, al: bert_with_additional_task_forward(p, cfg, ids, il, al)
    )
    out = fwd(params, input_ids, input_labels, addi_labels)
    out = jax.tree_util.tree_map(jax.block_until_ready, out)

    assert out["logits"].shape == (B, S, cfg.vocab_size)
    assert out["loss"].shape == ()
    assert jnp.isfinite(out["loss"])
    print("KERNEL_OK")
</pallas_src>

<mosaic_0001>
module attributes {stable_mosaic.version = 11 : i64} {
  func.func @_fused_kernel(%arg0: memref<16x128xf32, #tpu.memory_space<vmem>>, %arg1: memref<128x256xf32, #tpu.memory_space<vmem>>, %arg2: memref<1x256xf32, #tpu.memory_space<vmem>>, %arg3: memref<256x128xf32, #tpu.memory_space<vmem>>, %arg4: memref<1x128xf32, #tpu.memory_space<vmem>>, %arg5: memref<128x256xf32, #tpu.memory_space<vmem>>, %arg6: memref<1x256xf32, #tpu.memory_space<vmem>>, %arg7: memref<256x128xf32, #tpu.memory_space<vmem>>, %arg8: memref<1x128xf32, #tpu.memory_space<vmem>>, %arg9: memref<16x1xi32, #tpu.memory_space<vmem>>, %arg10: memref<16x1xi32, #tpu.memory_space<vmem>>, %arg11: memref<16x256xf32, #tpu.memory_space<vmem>>, %arg12: memref<4xf32, #tpu.memory_space<smem>>) attributes {dimension_semantics = [], scalar_prefetch = 0 : i64, scratch_operands = 0 : i64, tpu.core_type = #tpu.core_type<tc>} {
    %c0 = arith.constant 0 : index
    %c0_0 = arith.constant 0 : index
    %0 = vector.load %arg0[%c0, %c0_0] : memref<16x128xf32, #tpu.memory_space<vmem>>, vector<16x128xf32>
    %c0_1 = arith.constant 0 : index
    %c0_2 = arith.constant 0 : index
    %1 = vector.load %arg1[%c0_1, %c0_2] : memref<128x256xf32, #tpu.memory_space<vmem>>, vector<128x256xf32>
    %cst = arith.constant dense<0.000000e+00> : vector<16x256xf32>
    %2 = tpu.matmul %0, %1, %cst {dimension_numbers = #tpu.dot_dimension_numbers<[1], [0], [0], [1], [0, 0, 1, 1], [], []>} : vector<16x128xf32>, vector<128x256xf32>, vector<16x256xf32> -> vector<16x256xf32>
    %c0_3 = arith.constant 0 : index
    %c0_4 = arith.constant 0 : index
    %3 = vector.load %arg2[%c0_3, %c0_4] : memref<1x256xf32, #tpu.memory_space<vmem>>, vector<1x256xf32>
    %4 = vector.broadcast %3 : vector<1x256xf32> to vector<16x256xf32>
    %5 = arith.addf %2, %4 : vector<16x256xf32>
    %6 = arith.mulf %5, %5 : vector<16x256xf32>
    %7 = arith.mulf %5, %6 : vector<16x256xf32>
    %cst_5 = arith.constant 4.471500e-02 : f32
    %8 = vector.broadcast %cst_5 : f32 to vector<16x256xf32>
    %9 = arith.mulf %8, %7 : vector<16x256xf32>
    %10 = arith.addf %5, %9 : vector<16x256xf32>
    %cst_6 = arith.constant 0.797884583 : f32
    %11 = vector.broadcast %cst_6 : f32 to vector<16x256xf32>
    %12 = arith.mulf %11, %10 : vector<16x256xf32>
    %13 = math.tanh %12 : vector<16x256xf32>
    %cst_7 = arith.constant 1.000000e+00 : f32
    %14 = vector.broadcast %cst_7 : f32 to vector<16x256xf32>
    %15 = arith.addf %14, %13 : vector<16x256xf32>
    %cst_8 = arith.constant 5.000000e-01 : f32
    %16 = vector.broadcast %cst_8 : f32 to vector<16x256xf32>
    %17 = arith.mulf %16, %15 : vector<16x256xf32>
    %18 = arith.mulf %5, %17 : vector<16x256xf32>
    %c0_9 = arith.constant 0 : index
    %c0_10 = arith.constant 0 : index
    %19 = vector.load %arg3[%c0_9, %c0_10] : memref<256x128xf32, #tpu.memory_space<vmem>>, vector<256x128xf32>
    %cst_11 = arith.constant dense<0.000000e+00> : vector<16x128xf32>
    %20 = tpu.matmul %18, %19, %cst_11 {dimension_numbers = #tpu.dot_dimension_numbers<[1], [0], [0], [1], [0, 0, 1, 1], [], []>} : vector<16x256xf32>, vector<256x128xf32>, vector<16x128xf32> -> vector<16x128xf32>
    %c0_12 = arith.constant 0 : index
    %c0_13 = arith.constant 0 : index
    %21 = vector.load %arg4[%c0_12, %c0_13] : memref<1x128xf32, #tpu.memory_space<vmem>>, vector<1x128xf32>
    %22 = vector.broadcast %21 : vector<1x128xf32> to vector<16x128xf32>
    %23 = arith.addf %20, %22 : vector<16x128xf32>
    %24 = arith.addf %0, %23 : vector<16x128xf32>
    %c0_14 = arith.constant 0 : index
    %c0_15 = arith.constant 0 : index
    %25 = vector.load %arg5[%c0_14, %c0_15] : memref<128x256xf32, #tpu.memory_space<vmem>>, vector<128x256xf32>
    %cst_16 = arith.constant dense<0.000000e+00> : vector<16x256xf32>
    %26 = tpu.matmul %24, %25, %cst_16 {dimension_numbers = #tpu.dot_dimension_numbers<[1], [0], [0], [1], [0, 0, 1, 1], [], []>} : vector<16x128xf32>, vector<128x256xf32>, vector<16x256xf32> -> vector<16x256xf32>
    %c0_17 = arith.constant 0 : index
    %c0_18 = arith.constant 0 : index
    %27 = vector.load %arg6[%c0_17, %c0_18] : memref<1x256xf32, #tpu.memory_space<vmem>>, vector<1x256xf32>
    %28 = vector.broadcast %27 : vector<1x256xf32> to vector<16x256xf32>
    %29 = arith.addf %26, %28 : vector<16x256xf32>
    %c0_19 = arith.constant 0 : index
    %c0_20 = arith.constant 0 : index
    %30 = vector.load %arg11[%c0_19, %c0_20] : memref<16x256xf32, #tpu.memory_space<vmem>>, vector<16x256xf32>
    tpu.vector_store %arg11[%c0_19, %c0_20], %29 {strides = array<i32>} : memref<16x256xf32, #tpu.memory_space<vmem>>, vector<16x256xf32>,
    %c0_21 = arith.constant 0 : index
    %c0_22 = arith.constant 0 : index
    %31 = vector.load %arg9[%c0_21, %c0_22] : memref<16x1xi32, #tpu.memory_space<vmem>>, vector<16x1xi32>
    %cst_23 = arith.constant dense<0xFF800000> : vector<16xf32>
    %32 = vector.multi_reduction <maximumf>, %29, %cst_23 [1] : vector<16x256xf32> to vector<16xf32>
    %33 = vector.shape_cast %32 : vector<16xf32> to vector<16x1xf32>
    %34 = vector.broadcast %33 : vector<16x1xf32> to vector<16x256xf32>
    %35 = arith.subf %29, %34 : vector<16x256xf32>
    %36 = math.exp %35 : vector<16x256xf32>
    %cst_24 = arith.constant dense<0.000000e+00> : vector<16xf32>
    %37 = vector.multi_reduction <add>, %36, %cst_24 [1] : vector<16x256xf32> to vector<16xf32>
    %38 = vector.shape_cast %37 : vector<16xf32> to vector<16x1xf32>
    %39 = math.log %38 : vector<16x1xf32>
    %40 = arith.addf %33, %39 : vector<16x1xf32>
    %41 = tpu.iota {dimensions = array<i32: 1>} : vector<16x256xi32>
    %42 = vector.broadcast %31 : vector<16x1xi32> to vector<16x256xi32>
    %43 = arith.cmpi eq, %41, %42 : vector<16x256xi32>
    %cst_25 = arith.constant 0.000000e+00 : f32
    %44 = vector.broadcast %cst_25 : f32 to vector<16x256xf32>
    %45 = arith.select %43, %29, %44 : vector<16x256xi1>, vector<16x256xf32>
    %cst_26 = arith.constant dense<0.000000e+00> : vector<16xf32>
    %46 = vector.multi_reduction <add>, %45, %cst_26 [1] : vector<16x256xf32> to vector<16xf32>
    %47 = vector.shape_cast %46 : vector<16xf32> to vector<16x1xf32>
    %c0_i32 = arith.constant 0 : i32
    %48 = vector.broadcast %c0_i32 : i32 to vector<16x1xi32>
    %49 = arith.cmpi sge, %31, %48 : vector<16x1xi32>
    %50 = arith.subf %40, %47 : vector<16x1xf32>
    %cst_27 = arith.constant 0.000000e+00 : f32
    %51 = vector.broadcast %cst_27 : f32 to vector<16x1xf32>
    %52 = arith.select %49, %50, %51 : vector<16x1xi1>, vector<16x1xf32>
    %53 = vector.shape_cast %52 : vector<16x1xf32> to vector<1x16x1xf32>
    %cst_28 = arith.constant dense<0.000000e+00> : vector<1xf32>
    %54 = vector.multi_reduction <add>, %53, %cst_28 [1, 2] : vector<1x16x1xf32> to vector<1xf32>
    %55 = vector.shape_cast %54 : vector<1xf32> to vector<1x1x1xf32>
    %56 = vector.extract %55[0, 0, 0] : f32 from vector<1x1x1xf32>
    %57 = arith.extui %49 : vector<16x1xi1> to vector<16x1xi32>
    %58 = arith.sitofp %57 : vector<16x1xi32> to vector<16x1xf32>
    %59 = vector.shape_cast %58 : vector<16x1xf32> to vector<1x16x1xf32>
    %cst_29 = arith.constant dense<0.000000e+00> : vector<1xf32>
    %60 = vector.multi_reduction <add>, %59, %cst_29 [1, 2] : vector<1x16x1xf32> to vector<1xf32>
    %61 = vector.shape_cast %60 : vector<1xf32> to vector<1x1x1xf32>
    %62 = vector.extract %61[0, 0, 0] : f32 from vector<1x1x1xf32>
    %c0_30 = arith.constant 0 : index
    %c0_31 = arith.constant 0 : index
    %63 = vector.load %arg7[%c0_30, %c0_31] : memref<256x128xf32, #tpu.memory_space<vmem>>, vector<256x128xf32>
    %cst_32 = arith.constant dense<0.000000e+00> : vector<16x128xf32>
    %64 = tpu.matmul %29, %63, %cst_32 {dimension_numbers = #tpu.dot_dimension_numbers<[1], [0], [0], [1], [0, 0, 1, 1], [], []>} : vector<16x256xf32>, vector<256x128xf32>, vector<16x128xf32> -> vector<16x128xf32>
    %c0_33 = arith.constant 0 : index
    %c0_34 = arith.constant 0 : index
    %65 = vector.load %arg8[%c0_33, %c0_34] : memref<1x128xf32, #tpu.memory_space<vmem>>, vector<1x128xf32>
    %66 = vector.broadcast %65 : vector<1x128xf32> to vector<16x128xf32>
    %67 = arith.addf %64, %66 : vector<16x128xf32>
    %c0_35 = arith.constant 0 : index
    %c0_36 = arith.constant 0 : index
    %68 = vector.load %arg10[%c0_35, %c0_36] : memref<16x1xi32, #tpu.memory_space<vmem>>, vector<16x1xi32>
    %cst_37 = arith.constant dense<0xFF800000> : vector<16xf32>
    %69 = vector.multi_reduction <maximumf>, %67, %cst_37 [1] : vector<16x128xf32> to vector<16xf32>
    %70 = vector.shape_cast %69 : vector<16xf32> to vector<16x1xf32>
    %71 = vector.broadcast %70 : vector<16x1xf32> to vector<16x128xf32>
    %72 = arith.subf %67, %71 : vector<16x128xf32>
    %73 = math.exp %72 : vector<16x128xf32>
    %cst_38 = arith.constant dense<0.000000e+00> : vector<16xf32>
    %74 = vector.multi_reduction <add>, %73, %cst_38 [1] : vector<16x128xf32> to vector<16xf32>
    %75 = vector.shape_cast %74 : vector<16xf32> to vector<16x1xf32>
    %76 = math.log %75 : vector<16x1xf32>
    %77 = arith.addf %70, %76 : vector<16x1xf32>
    %78 = tpu.iota {dimensions = array<i32: 1>} : vector<16x128xi32>
    %79 = vector.broadcast %68 : vector<16x1xi32> to vector<16x128xi32>
    %80 = arith.cmpi eq, %78, %79 : vector<16x128xi32>
    %cst_39 = arith.constant 0.000000e+00 : f32
    %81 = vector.broadcast %cst_39 : f32 to vector<16x128xf32>
    %82 = arith.select %80, %67, %81 : vector<16x128xi1>, vector<16x128xf32>
    %cst_40 = arith.constant dense<0.000000e+00> : vector<16xf32>
    %83 = vector.multi_reduction <add>, %82, %cst_40 [1] : vector<16x128xf32> to vector<16xf32>
    %84 = vector.shape_cast %83 : vector<16xf32> to vector<16x1xf32>
    %c0_i32_41 = arith.constant 0 : i32
    %85 = vector.broadcast %c0_i32_41 : i32 to vector<16x1xi32>
    %86 = arith.cmpi sge, %68, %85 : vector<16x1xi32>
    %87 = arith.subf %77, %84 : vector<16x1xf32>
    %cst_42 = arith.constant 0.000000e+00 : f32
    %88 = vector.broadcast %cst_42 : f32 to vector<16x1xf32>
    %89 = arith.select %86, %87, %88 : vector<16x1xi1>, vector<16x1xf32>
    %90 = vector.shape_cast %89 : vector<16x1xf32> to vector<1x16x1xf32>
    %cst_43 = arith.constant dense<0.000000e+00> : vector<1xf32>
    %91 = vector.multi_reduction <add>, %90, %cst_43 [1, 2] : vector<1x16x1xf32> to vector<1xf32>
    %92 = vector.shape_cast %91 : vector<1xf32> to vector<1x1x1xf32>
    %93 = vector.extract %92[0, 0, 0] : f32 from vector<1x1x1xf32>
    %94 = arith.extui %86 : vector<16x1xi1> to vector<16x1xi32>
    %95 = arith.sitofp %94 : vector<16x1xi32> to vector<16x1xf32>
    %96 = vector.shape_cast %95 : vector<16x1xf32> to vector<1x16x1xf32>
    %cst_44 = arith.constant dense<0.000000e+00> : vector<1xf32>
    %97 = vector.multi_reduction <add>, %96, %cst_44 [1, 2] : vector<1x16x1xf32> to vector<1xf32>
    %98 = vector.shape_cast %97 : vector<1xf32> to vector<1x1x1xf32>
    %99 = vector.extract %98[0, 0, 0] : f32 from vector<1x1x1xf32>
    %c0_45 = arith.constant 0 : index
    %100 = memref.load %arg12[%c0_45] : memref<4xf32, #tpu.memory_space<smem>>
    memref.store %56, %arg12[%c0_45] : memref<4xf32, #tpu.memory_space<smem>>
    %c1 = arith.constant 1 : index
    %101 = memref.load %arg12[%c1] : memref<4xf32, #tpu.memory_space<smem>>
    memref.store %62, %arg12[%c1] : memref<4xf32, #tpu.memory_space<smem>>
    %c2 = arith.constant 2 : index
    %102 = memref.load %arg12[%c2] : memref<4xf32, #tpu.memory_space<smem>>
    memref.store %93, %arg12[%c2] : memref<4xf32, #tpu.memory_space<smem>>
    %c3 = arith.constant 3 : index
    %103 = memref.load %arg12[%c3] : memref<4xf32, #tpu.memory_space<smem>>
    memref.store %99, %arg12[%c3] : memref<4xf32, #tpu.memory_space<smem>>
    return
  }
}

</mosaic_0001>

<llo_original>
// kernel: _lambda_.1
$region0: #{_lambda_.1}
  #allocation0 [shape = 'u32[]', space=smem, size = 0x4, offset = 0x4, fixed_abs, tag = 'smem constant byte address 0x4 - core index']
  #allocation1 [shape = 'u32[72,128]{1,0:T(1,128)}', space=vmem, size = 0x9000, scoped, tag = 'internal scratch']
  %s0 = inlined_call_operand.vmem [shape: f32[16,128], index: 0, kind: input, shape index: {}]
  %s1 = inlined_call_operand.vmem [shape: f32[128,256], index: 1, kind: input, shape index: {}]
  %s2 = inlined_call_operand.vmem [shape: f32[1,256], index: 2, kind: input, shape index: {}]
  %s3 = inlined_call_operand.hbm [shape: f32[256,128], index: 3, kind: input, shape index: {}]
  %s4 = inlined_call_operand.vmem [shape: f32[1,128], index: 4, kind: input, shape index: {}]
  %s5 = inlined_call_operand.hbm [shape: f32[128,256], index: 5, kind: input, shape index: {}]
  %s6 = inlined_call_operand.vmem [shape: f32[1,256], index: 6, kind: input, shape index: {}]
  %s7 = inlined_call_operand.hbm [shape: f32[256,128], index: 7, kind: input, shape index: {}]
  %s8 = inlined_call_operand.vmem [shape: f32[1,128], index: 8, kind: input, shape index: {}]
  %s9 = inlined_call_operand.vmem [shape: s32[16,1], index: 9, kind: input, shape index: {}]
  %s10 = inlined_call_operand.vmem [shape: s32[16,1], index: 10, kind: input, shape index: {}]
  %s11 = inlined_call_operand.hbm [shape: f32[16,256], index: 11, kind: output, shape index: {0}]
  %s12 = inlined_call_operand.vmem [shape: f32[4], index: 12, kind: output, shape index: {1}]
  %13 = xla_tuple %s11, %s12
  %s14 = sld [smem:[#allocation0]]
  $region74: #{_lambda_.1} parent=0
    _
  %s16 = ssub.s32 1, %s14
  %s17 = scalar_select 0, %s16, %s14
  $region1: #{_lambda_.1} parent=0
    #allocation2 [shape = 'u8[131072]{0}', space=vmem, size = 0x20000, scoped, tag = 'input window, operand 3, single buffered']
    #allocation3 [shape = 's32[1]{0}', space=sflag, size = 0x4, scoped, tag = 'scoped memory for _lambda_.1']
    #allocation4 [shape = 's32[1]{0}', space=sflag, size = 0x4, scoped, tag = 'scoped memory for _lambda_.1']
    #allocation5 [shape = 's32[1]{0}', space=sflag, size = 0x4, scoped, tag = 'scoped memory for _lambda_.1']
    #allocation6 [shape = 'u8[131072]{0}', space=vmem, size = 0x20000, scoped, tag = 'input window, operand 5, single buffered']
    #allocation7 [shape = 's32[1]{0}', space=sflag, size = 0x4, scoped, tag = 'scoped memory for _lambda_.1']
    #allocation8 [shape = 'u8[131072]{0}', space=vmem, size = 0x20000, scoped, tag = 'input window, operand 7, single buffered']
    #allocation9 [shape = 'u8[16384]{0}', space=vmem, size = 0x4000, scoped, tag = 'output window, operand 0, single buffered']
    #allocation10 [shape = 'u8[512]{0}', space=smem, size = 0x200, scoped, tag = 'output window, operand 1, single buffered']
    %18 = vsyncpa [#allocation3], 0
    %19 = vsyncpa [#allocation7], 0
    %20 = vsyncpa [#allocation4], 0
    %21 = vsyncpa [#allocation5], 0
    // Predicated region
    $region2: #{_lambda_.1} parent=1 // pred_check
      _
    $region3: #{_lambda_.1} parent=1 // pred_check_branch
      %23 = sbr.rel (0) target = $region5
    $region4: #{_lambda_.1} parent=1 // pred_region
      _
    $region5: #{_lambda_.1} parent=1 // pred_fallthru
      _
    // Predicated region
    $region6: #{_lambda_.1} parent=1 // pred_check
      _
    $region7: #{_lambda_.1} parent=1 // pred_check_branch
      %25 = sbr.rel (0) target = $region9
    $region8: #{_lambda_.1} parent=1 // pred_region
      _
    $region9: #{_lambda_.1} parent=1 // pred_fallthru
      _
    // Predicated region
    $region10: #{_lambda_.1} parent=1 // pred_check
      _
    $region11: #{_lambda_.1} parent=1 // pred_check_branch
      %27 = sbr.rel (0) target = $region13
    $region12: #{_lambda_.1} parent=1 // pred_region
      _
    $region13: #{_lambda_.1} parent=1 // pred_fallthru
      _
    // Predicated region
    $region14: #{_lambda_.1} parent=1 // pred_check
      _
    $region15: #{_lambda_.1} parent=1 // pred_check_branch
      %29 = sbr.rel (0) target = $region17
    $region16: #{_lambda_.1} parent=1 // pred_region
      %31 = vsyncadd [#allocation3], 0
      %s32 = sshll.u32 %s3, 4
      %s33 = int_to_ptr.hbm [resolvable:$true] %s32
      %s34 = sshll.u32 [#allocation2], 4
      %s35 = int_to_ptr.vmem [resolvable:$true] %s34
      %40 = dma.hbm_to_vmem [thread:$0]  %s33, 4096, %s35, [#allocation3], 128, 128, 8
    $region17: #{_lambda_.1} parent=1 // pred_fallthru
      _
    // Predicated region
    $region18: #{_lambda_.1} parent=1 // pred_check
      _
    $region19: #{_lambda_.1} parent=1 // pred_check_branch
      %42 = sbr.rel (0) target = $region21
    $region20: #{_lambda_.1} parent=1 // pred_region
      _
    $region21: #{_lambda_.1} parent=1 // pred_fallthru
      _
    // Predicated region
    $region22: #{_lambda_.1} parent=1 // pred_check
      _
    $region23: #{_lambda_.1} parent=1 // pred_check_branch
      %44 = sbr.rel (0) target = $region25
    $region24: #{_lambda_.1} parent=1 // pred_region
      %46 = vsyncadd [#allocation7], 0
      %s47 = sshll.u32 %s5, 4
      %s48 = int_to_ptr.hbm [resolvable:$true] %s47
      %s49 = sshll.u32 [#allocation6], 4
      %s50 = int_to_ptr.vmem [resolvable:$true] %s49
      %55 = dma.hbm_to_vmem [thread:$0]  %s48, 4096, %s50, [#allocation7], 256, 256, 16
    $region25: #{_lambda_.1} parent=1 // pred_fallthru
      _
    // Predicated region
    $region26: #{_lambda_.1} parent=1 // pred_check
      _
    $region27: #{_lambda_.1} parent=1 // pred_check_branch
      %57 = sbr.rel (0) target = $region29
    $region28: #{_lambda_.1} parent=1 // pred_region
      _
    $region29: #{_lambda_.1} parent=1 // pred_fallthru
      _
    // Predicated region
    $region30: #{_lambda_.1} parent=1 // pred_check
      _
    $region31: #{_lambda_.1} parent=1 // pred_check_branch
      %59 = sbr.rel (0) target = $region33
    $region32: #{_lambda_.1} parent=1 // pred_region
      %61 = vsyncadd [#allocation7], 0
      %s62 = sshll.u32 %s7, 4
      %s63 = int_to_ptr.hbm [resolvable:$true] %s62
      %s64 = sshll.u32 [#allocation8], 4
      %s65 = int_to_ptr.vmem [resolvable:$true] %s64
      %70 = dma.hbm_to_vmem [thread:$0]  %s63, 4096, %s65, [#allocation7], 128, 128, 8
    $region33: #{_lambda_.1} parent=1 // pred_fallthru
      _
    // Predicated region
    $region34: #{_lambda_.1} parent=1 // pred_check
      _
    $region35: #{_lambda_.1} parent=1 // pred_check_branch
      %72 = sbr.rel (0) target = $region37
    $region36: #{_lambda_.1} parent=1 // pred_region
      _
    $region37: #{_lambda_.1} parent=1 // pred_fallthru
      _
    // Predicated region
    $region38: #{_lambda_.1} parent=1 // pred_check
      _
    $region39: #{_lambda_.1} parent=1 // pred_check_branch
      %74 = sbr.rel (0) target = $region41
    $region40: #{_lambda_.1} parent=1 // pred_region
      _
    $region41: #{_lambda_.1} parent=1 // pred_fallthru
      _
    // Predicated region
    $region42: #{_lambda_.1} parent=1 // pred_check
      _
    $region43: #{_lambda_.1} parent=1 // pred_check_branch
      %76 = sbr.rel (0) target = $region45
    $region44: #{_lambda_.1} parent=1 // pred_region
      _
    $region45: #{_lambda_.1} parent=1 // pred_fallthru
      _
    // Predicated region
    $region46: #{_lambda_.1} parent=1 // pred_check
      _
    $region47: #{_lambda_.1} parent=1 // pred_check_branch
      %78 = sbr.rel (0) target = $region49
    $region48: #{_lambda_.1} parent=1 // pred_region
      %80 = dma.done [#allocation3], 4096
    $region49: #{_lambda_.1} parent=1 // pred_fallthru
      _
    // Predicated region
    $region50: #{_lambda_.1} parent=1 // pred_check
      _
    $region51: #{_lambda_.1} parent=1 // pred_check_branch
      %82 = sbr.rel (0) target = $region53
    $region52: #{_lambda_.1} parent=1 // pred_region
      %84 = dma.done [#allocation7], 4096
    $region53: #{_lambda_.1} parent=1 // pred_fallthru
      _
    // Predicated region
    $region54: #{_lambda_.1} parent=1 // pred_check
      _
    $region55: #{_lambda_.1} parent=1 // pred_check_branch
      %86 = sbr.rel (0) target = $region57
    $region56: #{_lambda_.1} parent=1 // pred_region
      %88 = dma.done [#allocation7], 4096
    $region57: #{_lambda_.1} parent=1 // pred_fallthru
      _
    %v89 = vld [vmem:[%s0] sm:$0xff]
    %v90 = vld [vmem:[%s0 + $0x8] sm:$0xff]
    %v91 = vld [vmem:[%s1] sm:$0xff]
    %v92 = vld [vmem:[%s1 + $0x8] sm:$0xff]
    %v93 = vld [vmem:[%s1 + $0x10] sm:$0xff]
    %v94 = vld [vmem:[%s1 + $0x18] sm:$0xff]
    %v95 = vld [vmem:[%s1 + $0x20] sm:$0xff]
    %v96 = vld [vmem:[%s1 + $0x28] sm:$0xff]
    %v97 = vld [vmem:[%s1 + $0x30] sm:$0xff]
    %v98 = vld [vmem:[%s1 + $0x38] sm:$0xff]
    %v99 = vld [vmem:[%s1 + $0x40] sm:$0xff]
    %v100 = vld [vmem:[%s1 + $0x48] sm:$0xff]
    %v101 = vld [vmem:[%s1 + $0x50] sm:$0xff]
    %v102 = vld [vmem:[%s1 + $0x58] sm:$0xff]
    %v103 = vld [vmem:[%s1 + $0x60] sm:$0xff]
    %v104 = vld [vmem:[%s1 + $0x68] sm:$0xff]
    %v105 = vld [vmem:[%s1 + $0x70] sm:$0xff]
    %v106 = vld [vmem:[%s1 + $0x78] sm:$0xff]
    %v107 = vld [vmem:[%s1 + $0x80] sm:$0xff]
    %v108 = vld [vmem:[%s1 + $0x88] sm:$0xff]
    %v109 = vld [vmem:[%s1 + $0x90] sm:$0xff]
    %v110 = vld [vmem:[%s1 + $0x98] sm:$0xff]
    %v111 = vld [vmem:[%s1 + $0xa0] sm:$0xff]
    %v112 = vld [vmem:[%s1 + $0xa8] sm:$0xff]
    %v113 = vld [vmem:[%s1 + $0xb0] sm:$0xff]
    %v114 = vld [vmem:[%s1 + $0xb8] sm:$0xff]
    %v115 = vld [vmem:[%s1 + $0xc0] sm:$0xff]
    %v116 = vld [vmem:[%s1 + $0xc8] sm:$0xff]
    %v117 = vld [vmem:[%s1 + $0xd0] sm:$0xff]
    %v118 = vld [vmem:[%s1 + $0xd8] sm:$0xff]
    %v119 = vld [vmem:[%s1 + $0xe0] sm:$0xff]
    %v120 = vld [vmem:[%s1 + $0xe8] sm:$0xff]
    %v121 = vld [vmem:[%s1 + $0xf0] sm:$0xff]
    %v122 = vld [vmem:[%s1 + $0xf8] sm:$0xff]
    %v123 = vld [vmem:[%s2] sm:$0x3]
    %v125 = vperm.slane %v123, 0
    %v126 = vperm.slane %v123, 1
    %129 = vmatpush.msra.mxu0 %v121
    %130 = vmatpush.msra.mxu0 %v119
    %131 = vmatpush.msra.mxu0 %v117
    %132 = vmatpush.msra.mxu0 %v115
    %133 = vmatpush.msra.mxu0 %v113
    %134 = vmatpush.msra.mxu0 %v111
    %135 = vmatpush.msra.mxu0 %v109
    %136 = vmatpush.msra.mxu0 %v107
    %137 = vmatpush.msra.mxu0 %v105
    %138 = vmatpush.msra.mxu0 %v103
    %139 = vmatpush.msra.mxu0 %v101
    %140 = vmatpush.msra.mxu0 %v99
    %141 = vmatpush.msra.mxu0 %v97
    %142 = vmatpush.msra.mxu0 %v95
    %143 = vmatpush.msra.mxu0 %v93
    %144 = vmatpush.msra.mxu0 %v91
    %145 = vmatmul.f32.gmra.mxu0 %v89
    %v146 = vpop.f32.mrf.mxu0
    %v147 = vadd.f32 %v125, %v146
    %148 = vmatmul.f32.gmra.mxu0 %v90
    %v149 = vpop.f32.mrf.mxu0
    %v150 = vadd.f32 %v125, %v149
    %151 = vdwg.mxu0
    %152 = vmatpush.msra.mxu0 %v122
    %153 = vmatpush.msra.mxu0 %v120
    %154 = vmatpush.msra.mxu0 %v118
    %155 = vmatpush.msra.mxu0 %v116
    %156 = vmatpush.msra.mxu0 %v114
    %157 = vmatpush.msra.mxu0 %v112
    %158 = vmatpush.msra.mxu0 %v110
    %159 = vmatpush.msra.mxu0 %v108
    %160 = vmatpush.msra.mxu0 %v106
    %161 = vmatpush.msra.mxu0 %v104
    %162 = vmatpush.msra.mxu0 %v102
    %163 = vmatpush.msra.mxu0 %v100
    %164 = vmatpush.msra.mxu0 %v98
    %165 = vmatpush.msra.mxu0 %v96
    %166 = vmatpush.msra.mxu0 %v94
    %167 = vmatpush.msra.mxu0 %v92
    %168 = vmatmul.f32.gmra.mxu0 %v89
    %v169 = vpop.f32.mrf.mxu0
    %v170 = vadd.f32 %v126, %v169
    %171 = vmatmul.f32.gmra.mxu0 %v90
    %v172 = vpop.f32.mrf.mxu0
    %v173 = vadd.f32 %v126, %v172
    %174 = vdwg.mxu0
    %v175 = vmul.f32 %v147, %v147
    %v176 = vmul.f32 %v170, %v170
    %v177 = vmul.f32 %v150, %v150
    %v178 = vmul.f32 %v173, %v173
    %v179 = vmul.f32 %v147, %v175
    %v180 = vmul.f32 %v170, %v176
    %v181 = vmul.f32 %v150, %v177
    %v182 = vmul.f32 %v173, %v178
    %v183 = vmul.f32 %v179, 0.044715
    %v184 = vmul.f32 %v180, 0.044715
    %v185 = vmul.f32 %v181, 0.044715
    %v186 = vmul.f32 %v182, 0.044715
    %v187 = vadd.f32 %v147, %v183
    %v188 = vadd.f32 %v170, %v184
    %v189 = vadd.f32 %v150, %v185
    %v190 = vadd.f32 %v173, %v186
    %v191 = vmul.f32 %v187, 0.7978846
    %v192 = vmul.f32 %v188, 0.7978846
    %v193 = vmul.f32 %v189, 0.7978846
    %v194 = vmul.f32 %v190, 0.7978846
    %v195 = vtanh.pop %v191
    %v196 = vtanh.pop %v192
    %v197 = vtanh.pop %v193
    %v198 = vtanh.pop %v194
    %v199 = vadd.f32 %v195, 1.0
    %v200 = vadd.f32 %v196, 1.0
    %v201 = vadd.f32 %v197, 1.0
    %v202 = vadd.f32 %v198, 1.0
    %v203 = vmul.f32 %v199, 0.5
    %v204 = vmul.f32 %v200, 0.5
    %v205 = vmul.f32 %v201, 0.5
    %v206 = vmul.f32 %v202, 0.5
    %v207 = vmul.f32 %v147, %v203
    %v208 = vmul.f32 %v170, %v204
    %v209 = vmul.f32 %v150, %v205
    %v210 = vmul.f32 %v173, %v206
    %v211 = vld [vmem:[#allocation2] sm:$0xff]
    %v212 = vld [vmem:[#allocation2 + $0x8] sm:$0xff]
    %v213 = vld [vmem:[#allocation2 + $0x10] sm:$0xff]
    %v214 = vld [vmem:[#allocation2 + $0x18] sm:$0xff]
    %v215 = vld [vmem:[#allocation2 + $0x20] sm:$0xff]
    %v216 = vld [vmem:[#allocation2 + $0x28] sm:$0xff]
    %v217 = vld [vmem:[#allocation2 + $0x30] sm:$0xff]
    %v218 = vld [vmem:[#allocation2 + $0x38] sm:$0xff]
    %v219 = vld [vmem:[#allocation2 + $0x40] sm:$0xff]
    %v220 = vld [vmem:[#allocation2 + $0x48] sm:$0xff]
    %v221 = vld [vmem:[#allocation2 + $0x50] sm:$0xff]
    %v222 = vld [vmem:[#allocation2 + $0x58] sm:$0xff]
    %v223 = vld [vmem:[#allocation2 + $0x60] sm:$0xff]
    %v224 = vld [vmem:[#allocation2 + $0x68] sm:$0xff]
    %v225 = vld [vmem:[#allocation2 + $0x70] sm:$0xff]
    %v226 = vld [vmem:[#allocation2 + $0x78] sm:$0xff]
    %v227 = vld [vmem:[#allocation2 + $0x80] sm:$0xff]
    %v228 = vld [vmem:[#allocation2 + $0x88] sm:$0xff]
    %v229 = vld [vmem:[#allocation2 + $0x90] sm:$0xff]
    %v230 = vld [vmem:[#allocation2 + $0x98] sm:$0xff]
    %v231 = vld [vmem:[#allocation2 + $0xa0] sm:$0xff]
    %v232 = vld [vmem:[#allocation2 + $0xa8] sm:$0xff]
    %v233 = vld [vmem:[#allocation2 + $0xb0] sm:$0xff]
    %v234 = vld [vmem:[#allocation2 + $0xb8] sm:$0xff]
    %v235 = vld [vmem:[#allocation2 + $0xc0] sm:$0xff]
    %v236 = vld [vmem:[#allocation2 + $0xc8] sm:$0xff]
    %v237 = vld [vmem:[#allocation2 + $0xd0] sm:$0xff]
    %v238 = vld [vmem:[#allocation2 + $0xd8] sm:$0xff]
    %v239 = vld [vmem:[#allocation2 + $0xe0] sm:$0xff]
    %v240 = vld [vmem:[#allocation2 + $0xe8] sm:$0xff]
    %v241 = vld [vmem:[#allocation2 + $0xf0] sm:$0xff]
    %v242 = vld [vmem:[#allocation2 + $0xf8] sm:$0xff]
    %v243 = vld [vmem:[%s4] sm:$0x1]
    %v245 = vperm.slane %v243, 0
    %247 = vmatpush.msra.mxu0 %v226
    %248 = vmatpush.msra.mxu0 %v225
    %249 = vmatpush.msra.mxu0 %v224
    %250 = vmatpush.msra.mxu0 %v223
    %251 = vmatpush.msra.mxu0 %v222
    %252 = vmatpush.msra.mxu0 %v221
    %253 = vmatpush.msra.mxu0 %v220
    %254 = vmatpush.msra.mxu0 %v219
    %255 = vmatpush.msra.mxu0 %v218
    %256 = vmatpush.msra.mxu0 %v217
    %257 = vmatpush.msra.mxu0 %v216
    %258 = vmatpush.msra.mxu0 %v215
    %259 = vmatpush.msra.mxu0 %v214
    %260 = vmatpush.msra.mxu0 %v213
    %261 = vmatpush.msra.mxu0 %v212
    %262 = vmatpush.msra.mxu0 %v211
    %263 = vmatmul.f32.gmra.mxu0 %v207
    %v264 = vpop.f32.mrf.mxu0
    %v265 = vadd.f32 %v245, %v264
    %266 = vmatmul.f32.gmra.mxu0 %v209
    %v267 = vpop.f32.mrf.mxu0
    %v268 = vadd.f32 %v245, %v267
    %269 = vdwg.mxu0
    %270 = vmatpush.msra.mxu0 %v242
    %271 = vmatpush.msra.mxu0 %v241
    %272 = vmatpush.msra.mxu0 %v240
    %273 = vmatpush.msra.mxu0 %v239
    %274 = vmatpush.msra.mxu0 %v238
    %275 = vmatpush.msra.mxu0 %v237
    %276 = vmatpush.msra.mxu0 %v236
    %277 = vmatpush.msra.mxu0 %v235
    %278 = vmatpush.msra.mxu0 %v234
    %279 = vmatpush.msra.mxu0 %v233
    %280 = vmatpush.msra.mxu0 %v232
    %281 = vmatpush.msra.mxu0 %v231
    %282 = vmatpush.msra.mxu0 %v230
    %283 = vmatpush.msra.mxu0 %v229
    %284 = vmatpush.msra.mxu0 %v228
    %285 = vmatpush.msra.mxu0 %v227
    %286 = vmatmul.f32.gmra.mxu0 %v208
    %v287 = vpop.f32.mrf.mxu0
    %v288 = vadd.f32 %v265, %v287
    %289 = vmatmul.f32.gmra.mxu0 %v210
    %v290 = vpop.f32.mrf.mxu0
    %v291 = vadd.f32 %v268, %v290
    %292 = vdwg.mxu0
    %v293 = vadd.f32 %v89, %v288
    %v294 = vadd.f32 %v90, %v291
    %v295 = vld [vmem:[#allocation6] sm:$0xff]
    %v296 = vld [vmem:[#allocation6 + $0x8] sm:$0xff]
    %v297 = vld [vmem:[#allocation6 + $0x10] sm:$0xff]
    %v298 = vld [vmem:[#allocation6 + $0x18] sm:$0xff]
    %v299 = vld [vmem:[#allocation6 + $0x20] sm:$0xff]
    %v300 = vld [vmem:[#allocation6 + $0x28] sm:$0xff]
    %v301 = vld [vmem:[#allocation6 + $0x30] sm:$0xff]
    %v302 = vld [vmem:[#allocation6 + $0x38] sm:$0xff]
    %v303 = vld [vmem:[#allocation6 + $0x40] sm:$0xff]
    %v304 = vld [vmem:[#allocation6 + $0x48] sm:$0xff]
    %v305 = vld [vmem:[#allocation6 + $0x50] sm:$0xff]
    %v306 = vld [vmem:[#allocation6 + $0x58] sm:$0xff]
    %v307 = vld [vmem:[#allocation6 + $0x60] sm:$0xff]
    %v308 = vld [vmem:[#allocation6 + $0x68] sm:$0xff]
    %v309 = vld [vmem:[#allocation6 + $0x70] sm:$0xff]
    %v310 = vld [vmem:[#allocation6 + $0x78] sm:$0xff]
    %v311 = vld [vmem:[#allocation6 + $0x80] sm:$0xff]
    %v312 = vld [vmem:[#allocation6 + $0x88] sm:$0xff]
    %v313 = vld [vmem:[#allocation6 + $0x90] sm:$0xff]
    %v314 = vld [vmem:[#allocation6 + $0x98] sm:$0xff]
    %v315 = vld [vmem:[#allocation6 + $0xa0] sm:$0xff]
    %v316 = vld [vmem:[#allocation6 + $0xa8] sm:$0xff]
    %v317 = vld [vmem:[#allocation6 + $0xb0] sm:$0xff]
    %v318 = vld [vmem:[#allocation6 + $0xb8] sm:$0xff]
    %v319 = vld [vmem:[#allocation6 + $0xc0] sm:$0xff]
    %v320 = vld [vmem:[#allocation6 + $0xc8] sm:$0xff]
    %v321 = vld [vmem:[#allocation6 + $0xd0] sm:$0xff]
    %v322 = vld [vmem:[#allocation6 + $0xd8] sm:$0xff]
    %v323 = vld [vmem:[#allocation6 + $0xe0] sm:$0xff]
    %v324 = vld [vmem:[#allocation6 + $0xe8] sm:$0xff]
    %v325 = vld [vmem:[#allocation6 + $0xf0] sm:$0xff]
    %v326 = vld [vmem:[#allocation6 + $0xf8] sm:$0xff]
    %v327 = vld [vmem:[%s6] sm:$0x3]
    %v329 = vperm.slane %v327, 0
    %v330 = vperm.slane %v327, 1
    %333 = vmatpush.msra.mxu0 %v325
    %334 = vmatpush.msra.mxu0 %v323
    %335 = vmatpush.msra.mxu0 %v321
    %336 = vmatpush.msra.mxu0 %v319
    %337 = vmatpush.msra.mxu0 %v317
    %338 = vmatpush.msra.mxu0 %v315
    %339 = vmatpush.msra.mxu0 %v313
    %340 = vmatpush.msra.mxu0 %v311
    %341 = vmatpush.msra.mxu0 %v309
    %342 = vmatpush.msra.mxu0 %v307
    %343 = vmatpush.msra.mxu0 %v305
    %344 = vmatpush.msra.mxu0 %v303
    %345 = vmatpush.msra.mxu0 %v301
    %346 = vmatpush.msra.mxu0 %v299
    %347 = vmatpush.msra.mxu0 %v297
    %348 = vmatpush.msra.mxu0 %v295
    %349 = vmatmul.f32.gmra.mxu0 %v293
    %v350 = vpop.f32.mrf.mxu0
    %v351 = vadd.f32 %v329, %v350
    %352 = vmatmul.f32.gmra.mxu0 %v294
    %v353 = vpop.f32.mrf.mxu0
    %v354 = vadd.f32 %v329, %v353
    %355 = vdwg.mxu0
    %356 = vmatpush.msra.mxu0 %v326
    %357 = vmatpush.msra.mxu0 %v324
    %358 = vmatpush.msra.mxu0 %v322
    %359 = vmatpush.msra.mxu0 %v320
    %360 = vmatpush.msra.mxu0 %v318
    %361 = vmatpush.msra.mxu0 %v316
    %362 = vmatpush.msra.mxu0 %v314
    %363 = vmatpush.msra.mxu0 %v312
    %364 = vmatpush.msra.mxu0 %v310
    %365 = vmatpush.msra.mxu0 %v308
    %366 = vmatpush.msra.mxu0 %v306
    %367 = vmatpush.msra.mxu0 %v304
    %368 = vmatpush.msra.mxu0 %v302
    %369 = vmatpush.msra.mxu0 %v300
    %370 = vmatpush.msra.mxu0 %v298
    %371 = vmatpush.msra.mxu0 %v296
    %372 = vmatmul.f32.gmra.mxu0 %v293
    %v373 = vpop.f32.mrf.mxu0
    %v374 = vadd.f32 %v330, %v373
    %375 = vmatmul.f32.gmra.mxu0 %v294
    %v376 = vpop.f32.mrf.mxu0
    %v377 = vadd.f32 %v330, %v376
    %378 = vdwg.mxu0
    %379 = vst [vmem:[#allocation9] sm:$0xff] %v351
    %380 = vst [vmem:[#allocation9 + $0x8] sm:$0xff] %v374
    %381 = vst [vmem:[#allocation9 + $0x10] sm:$0xff] %v354
    %382 = vst [vmem:[#allocation9 + $0x18] sm:$0xff] %v377
    %v383 = vld [vmem:[%s9] sm:$0xff]
    %v384 = vld [vmem:[%s9 + $0x8] sm:$0xff]
    %v385 = vmax.f32 %v351, %v374
    %386 = vmax.xlane.f32.xlu0 %v385
    %v387 = vpop.xlane.xlu0 %386
    %v388 = vmax.f32 %v354, %v377
    %389 = vmax.xlane.f32.xlu0 %v388
    %v390 = vpop.xlane.xlu0 %389
    %v391 = vsub.f32 %v351, %v387
    %v392 = vsub.f32 %v374, %v387
    %v393 = vsub.f32 %v354, %v390
    %v394 = vsub.f32 %v377, %v390
    %v395 = vmul.f32 %v391, 1.442695
    %v396 = vpow.pop %v395
    %v397 = vmul.f32 %v392, 1.442695
    %v398 = vpow.pop %v397
    %v399 = vmul.f32 %v393, 1.442695
    %v400 = vpow.pop %v399
    %v401 = vmul.f32 %v394, 1.442695
    %v402 = vpow.pop %v401
    %v403 = vadd.f32 %v396, %v398
    %404 = vadd.xlane.f32.xlu0 %v403
    %v405 = vpop.xlane.xlu0 %404
    %v406 = vadd.f32 %v400, %v402
    %407 = vadd.xlane.f32.xlu0 %v406
    %v408 = vpop.xlane.xlu0 %407
    %v409 = vlog2.pop %v405
    %v410 = vmul.f32 %v409, 0.6931472
    %v411 = vlog2.pop %v408
    %v412 = vmul.f32 %v411, 0.6931472
    %v413 = vadd.f32 %v387, %v410
    %v414 = vadd.f32 %v390, %v412
    %v415 = vlaneseq
    %v416 = vand.u32 %v415, 127
    %v417 = vadd.s32 %v416, 128
    %418 = vset.pattern.permute.xlu0 0
    %419 = vperm.xlu0 %418, %v383
    %v420 = vpop.permute.xlu0 %419
    %421 = vset.pattern.permute.xlu0 0
    %422 = vperm.xlu0 %421, %v384
    %v423 = vpop.permute.xlu0 %422
    %vm424 = vcmp.eq.s32.totalorder %v416, %v420
    %vm425 = vcmp.eq.s32.totalorder %v417, %v420
    %vm426 = vcmp.eq.s32.totalorder %v416, %v423
    %vm427 = vcmp.eq.s32.totalorder %v417, %v423
    %v428 = vsel %vm424, %v351, 0.0
    %v429 = vsel %vm425, %v374, 0.0
    %v430 = vsel %vm426, %v354, 0.0
    %v431 = vsel %vm427, %v377, 0.0
    %v432 = vadd.f32 %v428, %v429
    %433 = vadd.xlane.f32.xlu0 %v432
    %v434 = vpop.xlane.xlu0 %433
    %v435 = vadd.f32 %v430, %v431
    %436 = vadd.xlane.f32.xlu0 %v435
    %v437 = vpop.xlane.xlu0 %436
    %vm438 = vcmp.ge.s32.totalorder %v383, 0
    %vm439 = vcmp.ge.s32.totalorder %v384, 0
    %v440 = vsub.f32 %v413, %v434
    %v441 = vsub.f32 %v414, %v437
    %v442 = vsel %vm438, %v440, 0.0
    %v443 = vsel %vm439, %v441, 0.0
    %vm444 = vcmask 7168
    %v445 = vsel %vm444, %v442, 0.0
    %v446 = vsel %vm444, %v443, 0.0
    %v447 = vadd.f32 %v445, %v446
    %448 = vadd.xlane.f32.xlu0 %v447
    %v449 = vpop.xlane.xlu0 %448
    %v450 = vrot.slane %v449, 4
    %v451 = vadd.f32 %v449, %v450
    %v452 = vrot.slane %v451, 2
    %v453 = vadd.f32 %v451, %v452
    %v454 = vrot.slane %v453, 1
    %v455 = vadd.f32 %v453, %v454
    %s456 = vtos %v455
    %v457 = vsel %vm438, 1, 0
    %v458 = vsel %vm439, 1, 0
    %v459 = vcvt.s32.f32 %v457
    %v460 = vcvt.s32.f32 %v458
    %v461 = vsel %vm444, %v459, 0.0
    %v462 = vsel %vm444, %v460, 0.0
    %v463 = vadd.f32 %v461, %v462
    %464 = vadd.xlane.f32.xlu0 %v463
    %v465 = vpop.xlane.xlu0 %464
    %v466 = vrot.slane %v465, 4
    %v467 = vadd.f32 %v465, %v466
    %v468 = vrot.slane %v467, 2
    %v469 = vadd.f32 %v467, %v468
    %v470 = vrot.slane %v469, 1
    %v471 = vadd.f32 %v469, %v470
    %s472 = vtos %v471
    %v473 = vld [vmem:[#allocation8] sm:$0xff]
    %v474 = vld [vmem:[#allocation8 + $0x8] sm:$0xff]
    %v475 = vld [vmem:[#allocation8 + $0x10] sm:$0xff]
    %v476 = vld [vmem:[#allocation8 + $0x18] sm:$0xff]
    %v477 = vld [vmem:[#allocation8 + $0x20] sm:$0xff]
    %v478 = vld [vmem:[#allocation8 + $0x28] sm:$0xff]
    %v479 = vld [vmem:[#allocation8 + $0x30] sm:$0xff]
    %v480 = vld [vmem:[#allocation8 + $0x38] sm:$0xff]
    %v481 = vld [vmem:[#allocation8 + $0x40] sm:$0xff]
    %v482 = vld [vmem:[#allocation8 + $0x48] sm:$0xff]
    %v483 = vld [vmem:[#allocation8 + $0x50] sm:$0xff]
    %v484 = vld [vmem:[#allocation8 + $0x58] sm:$0xff]
    %v485 = vld [vmem:[#allocation8 + $0x60] sm:$0xff]
    %v486 = vld [vmem:[#allocation8 + $0x68] sm:$0xff]
    %v487 = vld [vmem:[#allocation8 + $0x70] sm:$0xff]
    %v488 = vld [vmem:[#allocation8 + $0x78] sm:$0xff]
    %v489 = vld [vmem:[#allocation8 + $0x80] sm:$0xff]
    %v490 = vld [vmem:[#allocation8 + $0x88] sm:$0xff]
    %v491 = vld [vmem:[#allocation8 + $0x90] sm:$0xff]
    %v492 = vld [vmem:[#allocation8 + $0x98] sm:$0xff]
    %v493 = vld [vmem:[#allocation8 + $0xa0] sm:$0xff]
    %v494 = vld [vmem:[#allocation8 + $0xa8] sm:$0xff]
    %v495 = vld [vmem:[#allocation8 + $0xb0] sm:$0xff]
    %v496 = vld [vmem:[#allocation8 + $0xb8] sm:$0xff]
    %v497 = vld [vmem:[#allocation8 + $0xc0] sm:$0xff]
    %v498 = vld [vmem:[#allocation8 + $0xc8] sm:$0xff]
    %v499 = vld [vmem:[#allocation8 + $0xd0] sm:$0xff]
    %v500 = vld [vmem:[#allocation8 + $0xd8] sm:$0xff]
    %v501 = vld [vmem:[#allocation8 + $0xe0] sm:$0xff]
    %v502 = vld [vmem:[#allocation8 + $0xe8] sm:$0xff]
    %v503 = vld [vmem:[#allocation8 + $0xf0] sm:$0xff]
    %v504 = vld [vmem:[#allocation8 + $0xf8] sm:$0xff]
    %v505 = vld [vmem:[%s8] sm:$0x1]
    %v507 = vperm.slane %v505, 0
    %509 = vmatpush.msra.mxu0 %v488
    %510 = vmatpush.msra.mxu0 %v487
    %511 = vmatpush.msra.mxu0 %v486
    %512 = vmatpush.msra.mxu0 %v485
    %513 = vmatpush.msra.mxu0 %v484
    %514 = vmatpush.msra.mxu0 %v483
    %515 = vmatpush.msra.mxu0 %v482
    %516 = vmatpush.msra.mxu0 %v481
    %517 = vmatpush.msra.mxu0 %v480
    %518 = vmatpush.msra.mxu0 %v479
    %519 = vmatpush.msra.mxu0 %v478
    %520 = vmatpush.msra.mxu0 %v477
    %521 = vmatpush.msra.mxu0 %v476
    %522 = vmatpush.msra.mxu0 %v475
    %523 = vmatpush.msra.mxu0 %v474
    %524 = vmatpush.msra.mxu0 %v473
    %525 = vmatmul.f32.gmra.mxu0 %v351
    %v526 = vpop.f32.mrf.mxu0
    %v527 = vadd.f32 %v507, %v526
    %528 = vmatmul.f32.gmra.mxu0 %v354
    %v529 = vpop.f32.mrf.mxu0
    %v530 = vadd.f32 %v507, %v529
    %531 = vdwg.mxu0
    %532 = vmatpush.msra.mxu0 %v504
    %533 = vmatpush.msra.mxu0 %v503
    %534 = vmatpush.msra.mxu0 %v502
    %535 = vmatpush.msra.mxu0 %v501
    %536 = vmatpush.msra.mxu0 %v500
    %537 = vmatpush.msra.mxu0 %v499
    %538 = vmatpush.msra.mxu0 %v498
    %539 = vmatpush.msra.mxu0 %v497
    %540 = vmatpush.msra.mxu0 %v496
    %541 = vmatpush.msra.mxu0 %v495
    %542 = vmatpush.msra.mxu0 %v494
    %543 = vmatpush.msra.mxu0 %v493
    %544 = vmatpush.msra.mxu0 %v492
    %545 = vmatpush.msra.mxu0 %v491
    %546 = vmatpush.msra.mxu0 %v490
    %547 = vmatpush.msra.mxu0 %v489
    %548 = vmatmul.f32.gmra.mxu0 %v374
    %v549 = vpop.f32.mrf.mxu0
    %v550 = vadd.f32 %v527, %v549
    %551 = vmatmul.f32.gmra.mxu0 %v377
    %v552 = vpop.f32.mrf.mxu0
    %v553 = vadd.f32 %v530, %v552
    %554 = vdwg.mxu0
    %v555 = vld [vmem:[%s10] sm:$0xff]
    %v556 = vld [vmem:[%s10 + $0x8] sm:$0xff]
    %557 = vmax.xlane.f32.xlu0 %v550
    %v558 = vpop.xlane.xlu0 %557
    %559 = vmax.xlane.f32.xlu0 %v553
    %v560 = vpop.xlane.xlu0 %559
    %v561 = vsub.f32 %v550, %v558
    %v562 = vsub.f32 %v553, %v560
    %v563 = vmul.f32 %v561, 1.442695
    %v564 = vpow.pop %v563
    %v565 = vmul.f32 %v562, 1.442695
    %v566 = vpow.pop %v565
    %567 = vadd.xlane.f32.xlu0 %v564
    %v568 = vpop.xlane.xlu0 %567
    %569 = vadd.xlane.f32.xlu0 %v566
    %v570 = vpop.xlane.xlu0 %569
    %v571 = vlog2.pop %v568
    %v572 = vmul.f32 %v571, 0.6931472
    %v573 = vlog2.pop %v570
    %v574 = vmul.f32 %v573, 0.6931472
    %v575 = vadd.f32 %v558, %v572
    %v576 = vadd.f32 %v560, %v574
    %577 = vset.pattern.permute.xlu0 0
    %578 = vperm.xlu0 %577, %v555
    %v579 = vpop.permute.xlu0 %578
    %580 = vset.pattern.permute.xlu0 0
    %581 = vperm.xlu0 %580, %v556
    %v582 = vpop.permute.xlu0 %581
    %vm583 = vcmp.eq.s32.totalorder %v416, %v579
    %vm584 = vcmp.eq.s32.totalorder %v416, %v582
    %v585 = vsel %vm583, %v550, 0.0
    %v586 = vsel %vm584, %v553, 0.0
    %587 = vadd.xlane.f32.xlu0 %v585
    %v588 = vpop.xlane.xlu0 %587
    %589 = vadd.xlane.f32.xlu0 %v586
    %v590 = vpop.xlane.xlu0 %589
    %vm591 = vcmp.ge.s32.totalorder %v555, 0
    %vm592 = vcmp.ge.s32.totalorder %v556, 0
    %v593 = vsub.f32 %v575, %v588
    %v594 = vsub.f32 %v576, %v590
    %v595 = vsel %vm591, %v593, 0.0
    %v596 = vsel %vm592, %v594, 0.0
    %v597 = vsel %vm444, %v595, 0.0
    %v598 = vsel %vm444, %v596, 0.0
    %v599 = vadd.f32 %v597, %v598
    %600 = vadd.xlane.f32.xlu0 %v599
    %v601 = vpop.xlane.xlu0 %600
    %v602 = vrot.slane %v601, 4
    %v603 = vadd.f32 %v601, %v602
    %v604 = vrot.slane %v603, 2
    %v605 = vadd.f32 %v603, %v604
    %v606 = vrot.slane %v605, 1
    %v607 = vadd.f32 %v605, %v606
    %s608 = vtos %v607
    %v609 = vsel %vm591, 1, 0
    %v610 = vsel %vm592, 1, 0
    %v611 = vcvt.s32.f32 %v609
    %v612 = vcvt.s32.f32 %v610
    %v613 = vsel %vm444, %v611, 0.0
    %v614 = vsel %vm444, %v612, 0.0
    %v615 = vadd.f32 %v613, %v614
    %616 = vadd.xlane.f32.xlu0 %v615
    %v617 = vpop.xlane.xlu0 %616
    %v618 = vrot.slane %v617, 4
    %v619 = vadd.f32 %v617, %v618
    %v620 = vrot.slane %v619, 2
    %v621 = vadd.f32 %v619, %v620
    %v622 = vrot.slane %v621, 1
    %v623 = vadd.f32 %v621, %v622
    %s624 = vtos %v623
    %s625 = scalar_lea.smem [#allocation10], 0
    %626 = sst [smem:[%s625]] %s456
    %s627 = scalar_lea.smem [#allocation10], 1
    %628 = sst [smem:[%s627]] %s472
    %s629 = scalar_lea.smem [#allocation10], 2
    %630 = sst [smem:[%s629]] %s608
    %s631 = scalar_lea.smem [#allocation10], 3
    %632 = sst [smem:[%s631]] %s624
    // Predicated region
    $region58: #{_lambda_.1} parent=1 // pred_check
      _
    $region59: #{_lambda_.1} parent=1 // pred_check_branch
      %634 = sbr.rel (0) target = $region61
    $region60: #{_lambda_.1} parent=1 // pred_region
      %636 = vsyncadd [#allocation4], 0
      %s637 = sshll.u32 [#allocation9], 4
      %s638 = int_to_ptr.vmem [resolvable:$true] %s637
      %s639 = sshll.u32 %s11, 4
      %s640 = int_to_ptr.hbm [resolvable:$true] %s639
      %645 = dma.vmem_to_hbm [thread:$0]  %s638, 512, %s640, [#allocation4], 256, 256, 16
    $region61: #{_lambda_.1} parent=1 // pred_fallthru
      _
    // Predicated region
    $region62: #{_lambda_.1} parent=1 // pred_check
      _
    $region63: #{_lambda_.1} parent=1 // pred_check_branch
      %647 = sbr.rel (0) target = $region65
    $region64: #{_lambda_.1} parent=1 // pred_region
      %649 = vsyncadd [#allocation5], 0
      %s651 = sshll.u32 %s12, 4
      %s652 = int_to_ptr.vmem [resolvable:$true] %s651
      %654 = dma.smem_to_vmem [#allocation10], 16, %s652, [#allocation5]
    $region65: #{_lambda_.1} parent=1 // pred_fallthru
      _
    // Predicated region
    $region66: #{_lambda_.1} parent=1 // pred_check
      _
    $region67: #{_lambda_.1} parent=1 // pred_check_branch
      %656 = sbr.rel (0) target = $region69
    $region68: #{_lambda_.1} parent=1 // pred_region
      %658 = dma.done [#allocation4], 512
    $region69: #{_lambda_.1} parent=1 // pred_fallthru
      _
    // Predicated region
    $region70: #{_lambda_.1} parent=1 // pred_check
      _
    $region71: #{_lambda_.1} parent=1 // pred_check_branch
      %660 = sbr.rel (0) target = $region73
    $region72: #{_lambda_.1} parent=1 // pred_region
      %662 = dma.done [#allocation5], 16
    $region73: #{_lambda_.1} parent=1 // pred_fallthru
      _
    %663 = sfence
    %664 = vsyncpa [#allocation3], 1
    %665 = vsyncpa [#allocation7], 1
    %666 = vsyncpa [#allocation4], 1
    %667 = vsyncpa [#allocation5], 1

</llo_original>
